<compile_context>
chip_gen: v6e
topology: v6e:2x2x1
jax: 0.10.0
libtpu: 0.0.40
codegen_flags: <defaults>
</compile_context>

<pallas_src>
import jax
import jax.numpy as jnp
from jax.experimental import pallas as pl
from jax.experimental.pallas import tpu as pltpu


def _se_gate_mul_kernel(s_ref, w_ref, b_ref, x_ref, o_ref):
    # s_ref: (1, Cin)      squeeze vector (the 1x1 conv input)
    # w_ref: (Cout, Cin)   1x1 conv weight, PyTorch layout
    # b_ref: (Cout, 1)     conv bias
    # x_ref: (Cout, HW)    channels-first activations (N=1 squeezed)
    # o_ref: (Cout, HW)
    s = s_ref[...].astype(jnp.float32)     # in-kernel casts (no-ops if already f32)
    w = w_ref[...].astype(jnp.float32)
    b = b_ref[...].astype(jnp.float32)

    # Tiny matvec as VPU mul + XLU lane-reduce (avoids MXU push/pop latency).
    logits = jnp.sum(w * s, axis=1, keepdims=True) + b        # (Cout, 1)
    gate = jax.nn.sigmoid(logits).astype(x_ref.dtype)         # (Cout, 1)

    # Broadcast gate along the lane (H*W) axis.
    o_ref[...] = x_ref[...] * gate


def se_gate_mul(x146, x143, weight, bias):
    """x146: (1, Cin, 1, 1), x143: (1, Cout, H, W) NCHW. Returns NCHW."""
    n, c_out, h, w = x143.shape
    c_in = x146.shape[1]
    hw = h * w
    assert n == 1, "module spec is batch 1"

    # Free views only — no dtype casts, no transposes in the wrapper.
    s = x146.reshape(1, c_in)                 # (1, Cin)
    wm = weight.reshape(c_out, c_in)          # (Cout, Cin)
    b = bias.reshape(c_out, 1)                # (Cout, 1)
    x = x143.reshape(c_out, hw)               # (Cout, HW)

    flops = 2 * c_out * c_in + c_out * hw
    bytes_accessed = (
        (s.size + wm.size + b.size) * jnp.dtype(weight.dtype).itemsize
        + 2 * x.size * jnp.dtype(x143.dtype).itemsize
    )

    out = pl.pallas_call(
        _se_gate_mul_kernel,
        out_shape=jax.ShapeDtypeStruct((c_out, hw), x143.dtype),
        in_specs=[
            pl.BlockSpec(memory_space=pltpu.MemorySpace.VMEM),
            pl.BlockSpec(memory_space=pltpu.MemorySpace.VMEM),
            pl.BlockSpec(memory_space=pltpu.MemorySpace.VMEM),
            pl.BlockSpec(memory_space=pltpu.MemorySpace.VMEM),
        ],
        out_specs=pl.BlockSpec(memory_space=pltpu.MemorySpace.VMEM),
        cost_estimate=pl.CostEstimate(
            flops=flops, transcendentals=c_out, bytes_accessed=bytes_accessed),
    )(s, wm, b, x)

    # TODO(synk): for peak perf this gate-multiply should be fused into the
    # producer/consumer of x143 (lane-dense layout negotiation); out of scope
    # for this standalone kernel.
    return out.reshape(n, c_out, h, w)        # free view back to NCHW


if __name__ == "__main__":
    key = jax.random.PRNGKey(0)
    k1, k2, k3, k4 = jax.random.split(key, 4)

    C_IN, C_OUT, H, W = 30, 336, 14, 14

    # Deterministic synthetic parameters (not a checkpoint).
    weight = jax.random.normal(k1, (C_OUT, C_IN, 1, 1), dtype=jnp.float32) * 0.05
    bias = jax.random.normal(k2, (C_OUT,), dtype=jnp.float32) * 0.05

    # Deterministic inputs matching the module's forward signature.
    x146 = jax.random.normal(k3, (1, C_IN, 1, 1), dtype=jnp.float32)
    x143 = jax.random.normal(k4, (1, C_OUT, H, W), dtype=jnp.float32)

    out = se_gate_mul(x146, x143, weight, bias)
    out = jax.block_until_ready(out)

    # Reference in plain JAX (same math as the PyTorch module).
    logits_ref = (x146.reshape(1, C_IN) @ weight.reshape(C_OUT, C_IN).T
                  + bias.reshape(1, C_OUT))
    gate_ref = jax.nn.sigmoid(logits_ref).reshape(1, C_OUT, 1, 1)
    ref = gate_ref * x143

    assert out.shape == (1, C_OUT, H, W)
    assert jnp.allclose(out, ref, atol=1e-5, rtol=1e-5)

    print("KERNEL_OK")
</pallas_src>

<mosaic_0001>
module attributes {stable_mosaic.version = 11 : i64} {
  func.func @_se_gate_mul_kernel(%arg0: memref<1x30xf32, #tpu.memory_space<vmem>>, %arg1: memref<336x30xf32, #tpu.memory_space<vmem>>, %arg2: memref<336x1xf32, #tpu.memory_space<vmem>>, %arg3: memref<336x196xf32, #tpu.memory_space<vmem>>, %arg4: memref<336x196xf32, #tpu.memory_space<vmem>>) attributes {dimension_semantics = [], scalar_prefetch = 0 : i64, scratch_operands = 0 : i64, tpu.core_type = #tpu.core_type<tc>} {
    %c0 = arith.constant 0 : index
    %c0_0 = arith.constant 0 : index
    %0 = vector.load %arg0[%c0, %c0_0] : memref<1x30xf32, #tpu.memory_space<vmem>>, vector<1x30xf32>
    %c0_1 = arith.constant 0 : index
    %c0_2 = arith.constant 0 : index
    %1 = vector.load %arg1[%c0_1, %c0_2] : memref<336x30xf32, #tpu.memory_space<vmem>>, vector<336x30xf32>
    %c0_3 = arith.constant 0 : index
    %c0_4 = arith.constant 0 : index
    %2 = vector.load %arg2[%c0_3, %c0_4] : memref<336x1xf32, #tpu.memory_space<vmem>>, vector<336x1xf32>
    %3 = vector.broadcast %0 : vector<1x30xf32> to vector<336x30xf32>
    %4 = arith.mulf %1, %3 : vector<336x30xf32>
    %cst = arith.constant dense<0.000000e+00> : vector<336xf32>
    %5 = vector.multi_reduction <add>, %4, %cst [1] : vector<336x30xf32> to vector<336xf32>
    %6 = vector.shape_cast %5 : vector<336xf32> to vector<336x1xf32>
    %7 = arith.addf %6, %2 : vector<336x1xf32>
    %8 = arith.negf %7 : vector<336x1xf32>
    %9 = math.exp %8 : vector<336x1xf32>
    %cst_5 = arith.constant 1.000000e+00 : f32
    %10 = vector.broadcast %cst_5 : f32 to vector<336x1xf32>
    %11 = arith.addf %10, %9 : vector<336x1xf32>
    %12 = arith.divf %10, %11 : vector<336x1xf32>
    %c0_6 = arith.constant 0 : index
    %c0_7 = arith.constant 0 : index
    %13 = vector.load %arg3[%c0_6, %c0_7] : memref<336x196xf32, #tpu.memory_space<vmem>>, vector<336x196xf32>
    %14 = vector.broadcast %12 : vector<336x1xf32> to vector<336x196xf32>
    %15 = arith.mulf %13, %14 : vector<336x196xf32>
    %c0_8 = arith.constant 0 : index
    %c0_9 = arith.constant 0 : index
    %16 = vector.load %arg4[%c0_8, %c0_9] : memref<336x196xf32, #tpu.memory_space<vmem>>, vector<336x196xf32>
    tpu.vector_store %arg4[%c0_8, %c0_9], %15 {strides = array<i32>} : memref<336x196xf32, #tpu.memory_space<vmem>>, vector<336x196xf32>,
    return
  }
}

</mosaic_0001>

<llo_original>
// kernel: tpu_custom_call.1
$region0: #{tpu_custom_call.1}
  #allocation0 [shape = 'u32[]', space=smem, size = 0x4, offset = 0x4, fixed_abs, tag = 'smem constant byte address 0x4 - core index']
  #allocation1 [shape = 'u32[144,128]{1,0:T(1,128)}', space=vmem, size = 0x12000, scoped, tag = 'internal scratch']
  %s0 = inlined_call_operand.vmem [shape: f32[1,30], index: 0, kind: input, shape index: {}]
  %s1 = inlined_call_operand.vmem [shape: f32[336,30], index: 1, kind: input, shape index: {}]
  %s2 = inlined_call_operand.vmem [shape: f32[336,1], index: 2, kind: input, shape index: {}]
  %s3 = inlined_call_operand.vmem [shape: f32[336,196], index: 3, kind: input, shape index: {}]
  %s4 = inlined_call_operand.vmem [shape: f32[336,196], index: 4, kind: output, shape index: {}]
  %s5 = sld [smem:[#allocation0]]
  $region26: #{tpu_custom_call.1} parent=0
    _
  %s7 = ssub.s32 1, %s5
  %s8 = scalar_select 0, %s7, %s5
  // Predicated region
  $region2: #{tpu_custom_call.1} parent=0 // pred_check
    _
  $region3: #{tpu_custom_call.1} parent=0 // pred_check_branch
    %10 = sbr.rel (0) target = $region5
  $region4: #{tpu_custom_call.1} parent=0 // pred_region
    _
  $region5: #{tpu_custom_call.1} parent=0 // pred_fallthru
    _
  // Predicated region
  $region6: #{tpu_custom_call.1} parent=0 // pred_check
    _
  $region7: #{tpu_custom_call.1} parent=0 // pred_check_branch
    %12 = sbr.rel (0) target = $region9
  $region8: #{tpu_custom_call.1} parent=0 // pred_region
    _
  $region9: #{tpu_custom_call.1} parent=0 // pred_fallthru
    _
  // Predicated region
  $region10: #{tpu_custom_call.1} parent=0 // pred_check
    _
  $region11: #{tpu_custom_call.1} parent=0 // pred_check_branch
    %14 = sbr.rel (0) target = $region13
  $region12: #{tpu_custom_call.1} parent=0 // pred_region
    _
  $region13: #{tpu_custom_call.1} parent=0 // pred_fallthru
    _
  // Predicated region
  $region14: #{tpu_custom_call.1} parent=0 // pred_check
    _
  $region15: #{tpu_custom_call.1} parent=0 // pred_check_branch
    %16 = sbr.rel (0) target = $region17
  $region16: #{tpu_custom_call.1} parent=0 // pred_region
    _
  $region17: #{tpu_custom_call.1} parent=0 // pred_fallthru
    _
  %v17 = vld [vmem:[%s0] sm:$0x1]
  %v18 = vld [vmem:[%s1] sm:$0xff]
  %v19 = vld [vmem:[%s1 + $0x8] sm:$0xff]
  %v20 = vld [vmem:[%s1 + $0x10] sm:$0xff]
  %v21 = vld [vmem:[%s1 + $0x18] sm:$0xff]
  %v22 = vld [vmem:[%s1 + $0x20] sm:$0xff]
  %v23 = vld [vmem:[%s1 + $0x28] sm:$0xff]
  %v24 = vld [vmem:[%s1 + $0x30] sm:$0xff]
  %v25 = vld [vmem:[%s1 + $0x38] sm:$0xff]
  %v26 = vld [vmem:[%s1 + $0x40] sm:$0xff]
  %v27 = vld [vmem:[%s1 + $0x48] sm:$0xff]
  %v28 = vld [vmem:[%s1 + $0x50] sm:$0xff]
  %v29 = vld [vmem:[%s1 + $0x58] sm:$0xff]
  %v30 = vld [vmem:[%s1 + $0x60] sm:$0xff]
  %v31 = vld [vmem:[%s1 + $0x68] sm:$0xff]
  %v32 = vld [vmem:[%s1 + $0x70] sm:$0xff]
  %v33 = vld [vmem:[%s1 + $0x78] sm:$0xff]
  %v34 = vld [vmem:[%s1 + $0x80] sm:$0xff]
  %v35 = vld [vmem:[%s1 + $0x88] sm:$0xff]
  %v36 = vld [vmem:[%s1 + $0x90] sm:$0xff]
  %v37 = vld [vmem:[%s1 + $0x98] sm:$0xff]
  %v38 = vld [vmem:[%s1 + $0xa0] sm:$0xff]
  %v39 = vld [vmem:[%s1 + $0xa8] sm:$0xff]
  %v40 = vld [vmem:[%s1 + $0xb0] sm:$0xff]
  %v41 = vld [vmem:[%s1 + $0xb8] sm:$0xff]
  %v42 = vld [vmem:[%s1 + $0xc0] sm:$0xff]
  %v43 = vld [vmem:[%s1 + $0xc8] sm:$0xff]
  %v44 = vld [vmem:[%s1 + $0xd0] sm:$0xff]
  %v45 = vld [vmem:[%s1 + $0xd8] sm:$0xff]
  %v46 = vld [vmem:[%s1 + $0xe0] sm:$0xff]
  %v47 = vld [vmem:[%s1 + $0xe8] sm:$0xff]
  %v48 = vld [vmem:[%s1 + $0xf0] sm:$0xff]
  %v49 = vld [vmem:[%s1 + $0xf8] sm:$0xff]
  %v50 = vld [vmem:[%s1 + $0x100] sm:$0xff]
  %v51 = vld [vmem:[%s1 + $0x108] sm:$0xff]
  %v52 = vld [vmem:[%s1 + $0x110] sm:$0xff]
  %v53 = vld [vmem:[%s1 + $0x118] sm:$0xff]
  %v54 = vld [vmem:[%s1 + $0x120] sm:$0xff]
  %v55 = vld [vmem:[%s1 + $0x128] sm:$0xff]
  %v56 = vld [vmem:[%s1 + $0x130] sm:$0xff]
  %v57 = vld [vmem:[%s1 + $0x138] sm:$0xff]
  %v58 = vld [vmem:[%s1 + $0x140] sm:$0xff]
  %v59 = vld [vmem:[%s1 + $0x148] sm:$0xff]
  %v60 = vld [vmem:[%s2] sm:$0xff]
  %v61 = vld [vmem:[%s2 + $0x8] sm:$0xff]
  %v62 = vld [vmem:[%s2 + $0x10] sm:$0xff]
  %v63 = vld [vmem:[%s2 + $0x18] sm:$0xff]
  %v64 = vld [vmem:[%s2 + $0x20] sm:$0xff]
  %v65 = vld [vmem:[%s2 + $0x28] sm:$0xff]
  %v66 = vld [vmem:[%s2 + $0x30] sm:$0xff]
  %v67 = vld [vmem:[%s2 + $0x38] sm:$0xff]
  %v68 = vld [vmem:[%s2 + $0x40] sm:$0xff]
  %v69 = vld [vmem:[%s2 + $0x48] sm:$0xff]
  %v70 = vld [vmem:[%s2 + $0x50] sm:$0xff]
  %v71 = vld [vmem:[%s2 + $0x58] sm:$0xff]
  %v72 = vld [vmem:[%s2 + $0x60] sm:$0xff]
  %v73 = vld [vmem:[%s2 + $0x68] sm:$0xff]
  %v74 = vld [vmem:[%s2 + $0x70] sm:$0xff]
  %v75 = vld [vmem:[%s2 + $0x78] sm:$0xff]
  %v76 = vld [vmem:[%s2 + $0x80] sm:$0xff]
  %v77 = vld [vmem:[%s2 + $0x88] sm:$0xff]
  %v78 = vld [vmem:[%s2 + $0x90] sm:$0xff]
  %v79 = vld [vmem:[%s2 + $0x98] sm:$0xff]
  %v80 = vld [vmem:[%s2 + $0xa0] sm:$0xff]
  %v81 = vld [vmem:[%s2 + $0xa8] sm:$0xff]
  %v82 = vld [vmem:[%s2 + $0xb0] sm:$0xff]
  %v83 = vld [vmem:[%s2 + $0xb8] sm:$0xff]
  %v84 = vld [vmem:[%s2 + $0xc0] sm:$0xff]
  %v85 = vld [vmem:[%s2 + $0xc8] sm:$0xff]
  %v86 = vld [vmem:[%s2 + $0xd0] sm:$0xff]
  %v87 = vld [vmem:[%s2 + $0xd8] sm:$0xff]
  %v88 = vld [vmem:[%s2 + $0xe0] sm:$0xff]
  %v89 = vld [vmem:[%s2 + $0xe8] sm:$0xff]
  %v90 = vld [vmem:[%s2 + $0xf0] sm:$0xff]
  %v91 = vld [vmem:[%s2 + $0xf8] sm:$0xff]
  %v92 = vld [vmem:[%s2 + $0x100] sm:$0xff]
  %v93 = vld [vmem:[%s2 + $0x108] sm:$0xff]
  %v94 = vld [vmem:[%s2 + $0x110] sm:$0xff]
  %v95 = vld [vmem:[%s2 + $0x118] sm:$0xff]
  %v96 = vld [vmem:[%s2 + $0x120] sm:$0xff]
  %v97 = vld [vmem:[%s2 + $0x128] sm:$0xff]
  %v98 = vld [vmem:[%s2 + $0x130] sm:$0xff]
  %v99 = vld [vmem:[%s2 + $0x138] sm:$0xff]
  %v100 = vld [vmem:[%s2 + $0x140] sm:$0xff]
  %v101 = vld [vmem:[%s2 + $0x148] sm:$0xff]
  %v103 = vlaneseq
  %v104 = vshrl.u32 %v103, 7
  %v105 = vsub.s32 0, %v104
  %v106 = vrot.slane %v17, %v105
  %v108 = vmul.f32 %v18, %v106
  %v109 = vmul.f32 %v19, %v106
  %v110 = vmul.f32 %v20, %v106
  %v111 = vmul.f32 %v21, %v106
  %v112 = vmul.f32 %v22, %v106
  %v113 = vmul.f32 %v23, %v106
  %v114 = vmul.f32 %v24, %v106
  %v115 = vmul.f32 %v25, %v106
  %v116 = vmul.f32 %v26, %v106
  %v117 = vmul.f32 %v27, %v106
  %v118 = vmul.f32 %v28, %v106
  %v119 = vmul.f32 %v29, %v106
  %v120 = vmul.f32 %v30, %v106
  %v121 = vmul.f32 %v31, %v106
  %v122 = vmul.f32 %v32, %v106
  %v123 = vmul.f32 %v33, %v106
  %v124 = vmul.f32 %v34, %v106
  %v125 = vmul.f32 %v35, %v106
  %v126 = vmul.f32 %v36, %v106
  %v127 = vmul.f32 %v37, %v106
  %v128 = vmul.f32 %v38, %v106
  %v129 = vmul.f32 %v39, %v106
  %v130 = vmul.f32 %v40, %v106
  %v131 = vmul.f32 %v41, %v106
  %v132 = vmul.f32 %v42, %v106
  %v133 = vmul.f32 %v43, %v106
  %v134 = vmul.f32 %v44, %v106
  %v135 = vmul.f32 %v45, %v106
  %v136 = vmul.f32 %v46, %v106
  %v137 = vmul.f32 %v47, %v106
  %v138 = vmul.f32 %v48, %v106
  %v139 = vmul.f32 %v49, %v106
  %v140 = vmul.f32 %v50, %v106
  %v141 = vmul.f32 %v51, %v106
  %v142 = vmul.f32 %v52, %v106
  %v143 = vmul.f32 %v53, %v106
  %v144 = vmul.f32 %v54, %v106
  %v145 = vmul.f32 %v55, %v106
  %v146 = vmul.f32 %v56, %v106
  %v147 = vmul.f32 %v57, %v106
  %v148 = vmul.f32 %v58, %v106
  %v149 = vmul.f32 %v59, %v106
  %vm150 = vcmask 244736
  %v151 = vsel %vm150, %v108, 0.0
  %152 = vadd.xlane.f32.xlu0 %v151
  %v153 = vpop.xlane.xlu0 %152
  %v154 = vsel %vm150, %v109, 0.0
  %155 = vadd.xlane.f32.xlu0 %v154
  %v156 = vpop.xlane.xlu0 %155
  %v157 = vsel %vm150, %v110, 0.0
  %158 = vadd.xlane.f32.xlu0 %v157
  %v159 = vpop.xlane.xlu0 %158
  %v160 = vsel %vm150, %v111, 0.0
  %161 = vadd.xlane.f32.xlu0 %v160
  %v162 = vpop.xlane.xlu0 %161
  %v163 = vsel %vm150, %v112, 0.0
  %164 = vadd.xlane.f32.xlu0 %v163
  %v165 = vpop.xlane.xlu0 %164
  %v166 = vsel %vm150, %v113, 0.0
  %167 = vadd.xlane.f32.xlu0 %v166
  %v168 = vpop.xlane.xlu0 %167
  %v169 = vsel %vm150, %v114, 0.0
  %170 = vadd.xlane.f32.xlu0 %v169
  %v171 = vpop.xlane.xlu0 %170
  %v172 = vsel %vm150, %v115, 0.0
  %173 = vadd.xlane.f32.xlu0 %v172
  %v174 = vpop.xlane.xlu0 %173
  %v175 = vsel %vm150, %v116, 0.0
  %176 = vadd.xlane.f32.xlu0 %v175
  %v177 = vpop.xlane.xlu0 %176
  %v178 = vsel %vm150, %v117, 0.0
  %179 = vadd.xlane.f32.xlu0 %v178
  %v180 = vpop.xlane.xlu0 %179
  %v181 = vsel %vm150, %v118, 0.0
  %182 = vadd.xlane.f32.xlu0 %v181
  %v183 = vpop.xlane.xlu0 %182
  %v184 = vsel %vm150, %v119, 0.0
  %185 = vadd.xlane.f32.xlu0 %v184
  %v186 = vpop.xlane.xlu0 %185
  %v187 = vsel %vm150, %v120, 0.0
  %188 = vadd.xlane.f32.xlu0 %v187
  %v189 = vpop.xlane.xlu0 %188
  %v190 = vsel %vm150, %v121, 0.0
  %191 = vadd.xlane.f32.xlu0 %v190
  %v192 = vpop.xlane.xlu0 %191
  %v193 = vsel %vm150, %v122, 0.0
  %194 = vadd.xlane.f32.xlu0 %v193
  %v195 = vpop.xlane.xlu0 %194
  %v196 = vsel %vm150, %v123, 0.0
  %197 = vadd.xlane.f32.xlu0 %v196
  %v198 = vpop.xlane.xlu0 %197
  %v199 = vsel %vm150, %v124, 0.0
  %200 = vadd.xlane.f32.xlu0 %v199
  %v201 = vpop.xlane.xlu0 %200
  %v202 = vsel %vm150, %v125, 0.0
  %203 = vadd.xlane.f32.xlu0 %v202
  %v204 = vpop.xlane.xlu0 %203
  %v205 = vsel %vm150, %v126, 0.0
  %206 = vadd.xlane.f32.xlu0 %v205
  %v207 = vpop.xlane.xlu0 %206
  %v208 = vsel %vm150, %v127, 0.0
  %209 = vadd.xlane.f32.xlu0 %v208
  %v210 = vpop.xlane.xlu0 %209
  %v211 = vsel %vm150, %v128, 0.0
  %212 = vadd.xlane.f32.xlu0 %v211
  %v213 = vpop.xlane.xlu0 %212
  %v214 = vsel %vm150, %v129, 0.0
  %215 = vadd.xlane.f32.xlu0 %v214
  %v216 = vpop.xlane.xlu0 %215
  %v217 = vsel %vm150, %v130, 0.0
  %218 = vadd.xlane.f32.xlu0 %v217
  %v219 = vpop.xlane.xlu0 %218
  %v220 = vsel %vm150, %v131, 0.0
  %221 = vadd.xlane.f32.xlu0 %v220
  %v222 = vpop.xlane.xlu0 %221
  %v223 = vsel %vm150, %v132, 0.0
  %224 = vadd.xlane.f32.xlu0 %v223
  %v225 = vpop.xlane.xlu0 %224
  %v226 = vsel %vm150, %v133, 0.0
  %227 = vadd.xlane.f32.xlu0 %v226
  %v228 = vpop.xlane.xlu0 %227
  %v229 = vsel %vm150, %v134, 0.0
  %230 = vadd.xlane.f32.xlu0 %v229
  %v231 = vpop.xlane.xlu0 %230
  %v232 = vsel %vm150, %v135, 0.0
  %233 = vadd.xlane.f32.xlu0 %v232
  %v234 = vpop.xlane.xlu0 %233
  %v235 = vsel %vm150, %v136, 0.0
  %236 = vadd.xlane.f32.xlu0 %v235
  %v237 = vpop.xlane.xlu0 %236
  %v238 = vsel %vm150, %v137, 0.0
  %239 = vadd.xlane.f32.xlu0 %v238
  %v240 = vpop.xlane.xlu0 %239
  %v241 = vsel %vm150, %v138, 0.0
  %242 = vadd.xlane.f32.xlu0 %v241
  %v243 = vpop.xlane.xlu0 %242
  %v244 = vsel %vm150, %v139, 0.0
  %245 = vadd.xlane.f32.xlu0 %v244
  %v246 = vpop.xlane.xlu0 %245
  %v247 = vsel %vm150, %v140, 0.0
  %248 = vadd.xlane.f32.xlu0 %v247
  %v249 = vpop.xlane.xlu0 %248
  %v250 = vsel %vm150, %v141, 0.0
  %251 = vadd.xlane.f32.xlu0 %v250
  %v252 = vpop.xlane.xlu0 %251
  %v253 = vsel %vm150, %v142, 0.0
  %254 = vadd.xlane.f32.xlu0 %v253
  %v255 = vpop.xlane.xlu0 %254
  %v256 = vsel %vm150, %v143, 0.0
  %257 = vadd.xlane.f32.xlu0 %v256
  %v258 = vpop.xlane.xlu0 %257
  %v259 = vsel %vm150, %v144, 0.0
  %260 = vadd.xlane.f32.xlu0 %v259
  %v261 = vpop.xlane.xlu0 %260
  %v262 = vsel %vm150, %v145, 0.0
  %263 = vadd.xlane.f32.xlu0 %v262
  %v264 = vpop.xlane.xlu0 %263
  %v265 = vsel %vm150, %v146, 0.0
  %266 = vadd.xlane.f32.xlu0 %v265
  %v267 = vpop.xlane.xlu0 %266
  %v268 = vsel %vm150, %v147, 0.0
  %269 = vadd.xlane.f32.xlu0 %v268
  %v270 = vpop.xlane.xlu0 %269
  %v271 = vsel %vm150, %v148, 0.0
  %272 = vadd.xlane.f32.xlu0 %v271
  %v273 = vpop.xlane.xlu0 %272
  %v274 = vsel %vm150, %v149, 0.0
  %275 = vadd.xlane.f32.xlu0 %v274
  %v276 = vpop.xlane.xlu0 %275
  %v277 = vadd.f32 %v153, %v60
  %v278 = vadd.f32 %v156, %v61
  %v279 = vadd.f32 %v159, %v62
  %v280 = vadd.f32 %v162, %v63
  %v281 = vadd.f32 %v165, %v64
  %v282 = vadd.f32 %v168, %v65
  %v283 = vadd.f32 %v171, %v66
  %v284 = vadd.f32 %v174, %v67
  %v285 = vadd.f32 %v177, %v68
  %v286 = vadd.f32 %v180, %v69
  %v287 = vadd.f32 %v183, %v70
  %v288 = vadd.f32 %v186, %v71
  %v289 = vadd.f32 %v189, %v72
  %v290 = vadd.f32 %v192, %v73
  %v291 = vadd.f32 %v195, %v74
  %v292 = vadd.f32 %v198, %v75
  %v293 = vadd.f32 %v201, %v76
  %v294 = vadd.f32 %v204, %v77
  %v295 = vadd.f32 %v207, %v78
  %v296 = vadd.f32 %v210, %v79
  %v297 = vadd.f32 %v213, %v80
  %v298 = vadd.f32 %v216, %v81
  %v299 = vadd.f32 %v219, %v82
  %v300 = vadd.f32 %v222, %v83
  %v301 = vadd.f32 %v225, %v84
  %v302 = vadd.f32 %v228, %v85
  %v303 = vadd.f32 %v231, %v86
  %v304 = vadd.f32 %v234, %v87
  %v305 = vadd.f32 %v237, %v88
  %v306 = vadd.f32 %v240, %v89
  %v307 = vadd.f32 %v243, %v90
  %v308 = vadd.f32 %v246, %v91
  %v309 = vadd.f32 %v249, %v92
  %v310 = vadd.f32 %v252, %v93
  %v311 = vadd.f32 %v255, %v94
  %v312 = vadd.f32 %v258, %v95
  %v313 = vadd.f32 %v261, %v96
  %v314 = vadd.f32 %v264, %v97
  %v315 = vadd.f32 %v267, %v98
  %v316 = vadd.f32 %v270, %v99
  %v317 = vadd.f32 %v273, %v100
  %v318 = vadd.f32 %v276, %v101
  %v319 = vxor.u32 %v277, 2147483648
  %v320 = vxor.u32 %v278, 2147483648
  %v321 = vxor.u32 %v279, 2147483648
  %v322 = vxor.u32 %v280, 2147483648
  %v323 = vxor.u32 %v281, 2147483648
  %v324 = vxor.u32 %v282, 2147483648
  %v325 = vxor.u32 %v283, 2147483648
  %v326 = vxor.u32 %v284, 2147483648
  %v327 = vxor.u32 %v285, 2147483648
  %v328 = vxor.u32 %v286, 2147483648
  %v329 = vxor.u32 %v287, 2147483648
  %v330 = vxor.u32 %v288, 2147483648
  %v331 = vxor.u32 %v289, 2147483648
  %v332 = vxor.u32 %v290, 2147483648
  %v333 = vxor.u32 %v291, 2147483648
  %v334 = vxor.u32 %v292, 2147483648
  %v335 = vxor.u32 %v293, 2147483648
  %v336 = vxor.u32 %v294, 2147483648
  %v337 = vxor.u32 %v295, 2147483648
  %v338 = vxor.u32 %v296, 2147483648
  %v339 = vxor.u32 %v297, 2147483648
  %v340 = vxor.u32 %v298, 2147483648
  %v341 = vxor.u32 %v299, 2147483648
  %v342 = vxor.u32 %v300, 2147483648
  %v343 = vxor.u32 %v301, 2147483648
  %v344 = vxor.u32 %v302, 2147483648
  %v345 = vxor.u32 %v303, 2147483648
  %v346 = vxor.u32 %v304, 2147483648
  %v347 = vxor.u32 %v305, 2147483648
  %v348 = vxor.u32 %v306, 2147483648
  %v349 = vxor.u32 %v307, 2147483648
  %v350 = vxor.u32 %v308, 2147483648
  %v351 = vxor.u32 %v309, 2147483648
  %v352 = vxor.u32 %v310, 2147483648
  %v353 = vxor.u32 %v311, 2147483648
  %v354 = vxor.u32 %v312, 2147483648
  %v355 = vxor.u32 %v313, 2147483648
  %v356 = vxor.u32 %v314, 2147483648
  %v357 = vxor.u32 %v315, 2147483648
  %v358 = vxor.u32 %v316, 2147483648
  %v359 = vxor.u32 %v317, 2147483648
  %v360 = vxor.u32 %v318, 2147483648
  %v361 = vmul.f32 %v319, 1.442695
  %v362 = vpow.pop %v361
  %v363 = vmul.f32 %v320, 1.442695
  %v364 = vpow.pop %v363
  %v365 = vmul.f32 %v321, 1.442695
  %v366 = vpow.pop %v365
  %v367 = vmul.f32 %v322, 1.442695
  %v368 = vpow.pop %v367
  %v369 = vmul.f32 %v323, 1.442695
  %v370 = vpow.pop %v369
  %v371 = vmul.f32 %v324, 1.442695
  %v372 = vpow.pop %v371
  %v373 = vmul.f32 %v325, 1.442695
  %v374 = vpow.pop %v373
  %v375 = vmul.f32 %v326, 1.442695
  %v376 = vpow.pop %v375
  %v377 = vmul.f32 %v327, 1.442695
  %v378 = vpow.pop %v377
  %v379 = vmul.f32 %v328, 1.442695
  %v380 = vpow.pop %v379
  %v381 = vmul.f32 %v329, 1.442695
  %v382 = vpow.pop %v381
  %v383 = vmul.f32 %v330, 1.442695
  %v384 = vpow.pop %v383
  %v385 = vmul.f32 %v331, 1.442695
  %v386 = vpow.pop %v385
  %v387 = vmul.f32 %v332, 1.442695
  %v388 = vpow.pop %v387
  %v389 = vmul.f32 %v333, 1.442695
  %v390 = vpow.pop %v389
  %v391 = vmul.f32 %v334, 1.442695
  %v392 = vpow.pop %v391
  %v393 = vmul.f32 %v335, 1.442695
  %v394 = vpow.pop %v393
  %v395 = vmul.f32 %v336, 1.442695
  %v396 = vpow.pop %v395
  %v397 = vmul.f32 %v337, 1.442695
  %v398 = vpow.pop %v397
  %v399 = vmul.f32 %v338, 1.442695
  %v400 = vpow.pop %v399
  %v401 = vmul.f32 %v339, 1.442695
  %v402 = vpow.pop %v401
  %v403 = vmul.f32 %v340, 1.442695
  %v404 = vpow.pop %v403
  %v405 = vmul.f32 %v341, 1.442695
  %v406 = vpow.pop %v405
  %v407 = vmul.f32 %v342, 1.442695
  %v408 = vpow.pop %v407
  %v409 = vmul.f32 %v343, 1.442695
  %v410 = vpow.pop %v409
  %v411 = vmul.f32 %v344, 1.442695
  %v412 = vpow.pop %v411
  %v413 = vmul.f32 %v345, 1.442695
  %v414 = vpow.pop %v413
  %v415 = vmul.f32 %v346, 1.442695
  %v416 = vpow.pop %v415
  %v417 = vmul.f32 %v347, 1.442695
  %v418 = vpow.pop %v417
  %v419 = vmul.f32 %v348, 1.442695
  %v420 = vpow.pop %v419
  %v421 = vmul.f32 %v349, 1.442695
  %v422 = vpow.pop %v421
  %v423 = vmul.f32 %v350, 1.442695
  %v424 = vpow.pop %v423
  %v425 = vmul.f32 %v351, 1.442695
  %v426 = vpow.pop %v425
  %v427 = vmul.f32 %v352, 1.442695
  %v428 = vpow.pop %v427
  %v429 = vmul.f32 %v353, 1.442695
  %v430 = vpow.pop %v429
  %v431 = vmul.f32 %v354, 1.442695
  %v432 = vpow.pop %v431
  %v433 = vmul.f32 %v355, 1.442695
  %v434 = vpow.pop %v433
  %v435 = vmul.f32 %v356, 1.442695
  %v436 = vpow.pop %v435
  %v437 = vmul.f32 %v357, 1.442695
  %v438 = vpow.pop %v437
  %v439 = vmul.f32 %v358, 1.442695
  %v440 = vpow.pop %v439
  %v441 = vmul.f32 %v359, 1.442695
  %v442 = vpow.pop %v441
  %v443 = vmul.f32 %v360, 1.442695
  %v444 = vpow.pop %v443
  %v445 = vadd.f32 %v362, 1.0
  %v446 = vadd.f32 %v364, 1.0
  %v447 = vadd.f32 %v366, 1.0
  %v448 = vadd.f32 %v368, 1.0
  %v449 = vadd.f32 %v370, 1.0
  %v450 = vadd.f32 %v372, 1.0
  %v451 = vadd.f32 %v374, 1.0
  %v452 = vadd.f32 %v376, 1.0
  %v453 = vadd.f32 %v378, 1.0
  %v454 = vadd.f32 %v380, 1.0
  %v455 = vadd.f32 %v382, 1.0
  %v456 = vadd.f32 %v384, 1.0
  %v457 = vadd.f32 %v386, 1.0
  %v458 = vadd.f32 %v388, 1.0
  %v459 = vadd.f32 %v390, 1.0
  %v460 = vadd.f32 %v392, 1.0
  %v461 = vadd.f32 %v394, 1.0
  %v462 = vadd.f32 %v396, 1.0
  %v463 = vadd.f32 %v398, 1.0
  %v464 = vadd.f32 %v400, 1.0
  %v465 = vadd.f32 %v402, 1.0
  %v466 = vadd.f32 %v404, 1.0
  %v467 = vadd.f32 %v406, 1.0
  %v468 = vadd.f32 %v408, 1.0
  %v469 = vadd.f32 %v410, 1.0
  %v470 = vadd.f32 %v412, 1.0
  %v471 = vadd.f32 %v414, 1.0
  %v472 = vadd.f32 %v416, 1.0
  %v473 = vadd.f32 %v418, 1.0
  %v474 = vadd.f32 %v420, 1.0
  %v475 = vadd.f32 %v422, 1.0
  %v476 = vadd.f32 %v424, 1.0
  %v477 = vadd.f32 %v426, 1.0
  %v478 = vadd.f32 %v428, 1.0
  %v479 = vadd.f32 %v430, 1.0
  %v480 = vadd.f32 %v432, 1.0
  %v481 = vadd.f32 %v434, 1.0
  %v482 = vadd.f32 %v436, 1.0
  %v483 = vadd.f32 %v438, 1.0
  %v484 = vadd.f32 %v440, 1.0
  %v485 = vadd.f32 %v442, 1.0
  %v486 = vadd.f32 %v444, 1.0
  %v487 = vrcp.pop %v445
  %v488 = vmul.f32 1.0, %v487
  %v489 = vrcp.pop %v446
  %v490 = vmul.f32 1.0, %v489
  %v491 = vrcp.pop %v447
  %v492 = vmul.f32 1.0, %v491
  %v493 = vrcp.pop %v448
  %v494 = vmul.f32 1.0, %v493
  %v495 = vrcp.pop %v449
  %v496 = vmul.f32 1.0, %v495
  %v497 = vrcp.pop %v450
  %v498 = vmul.f32 1.0, %v497
  %v499 = vrcp.pop %v451
  %v500 = vmul.f32 1.0, %v499
  %v501 = vrcp.pop %v452
  %v502 = vmul.f32 1.0, %v501
  %v503 = vrcp.pop %v453
  %v504 = vmul.f32 1.0, %v503
  %v505 = vrcp.pop %v454
  %v506 = vmul.f32 1.0, %v505
  %v507 = vrcp.pop %v455
  %v508 = vmul.f32 1.0, %v507
  %v509 = vrcp.pop %v456
  %v510 = vmul.f32 1.0, %v509
  %v511 = vrcp.pop %v457
  %v512 = vmul.f32 1.0, %v511
  %v513 = vrcp.pop %v458
  %v514 = vmul.f32 1.0, %v513
  %v515 = vrcp.pop %v459
  %v516 = vmul.f32 1.0, %v515
  %v517 = vrcp.pop %v460
  %v518 = vmul.f32 1.0, %v517
  %v519 = vrcp.pop %v461
  %v520 = vmul.f32 1.0, %v519
  %v521 = vrcp.pop %v462
  %v522 = vmul.f32 1.0, %v521
  %v523 = vrcp.pop %v463
  %v524 = vmul.f32 1.0, %v523
  %v525 = vrcp.pop %v464
  %v526 = vmul.f32 1.0, %v525
  %v527 = vrcp.pop %v465
  %v528 = vmul.f32 1.0, %v527
  %v529 = vrcp.pop %v466
  %v530 = vmul.f32 1.0, %v529
  %v531 = vrcp.pop %v467
  %v532 = vmul.f32 1.0, %v531
  %v533 = vrcp.pop %v468
  %v534 = vmul.f32 1.0, %v533
  %v535 = vrcp.pop %v469
  %v536 = vmul.f32 1.0, %v535
  %v537 = vrcp.pop %v470
  %v538 = vmul.f32 1.0, %v537
  %v539 = vrcp.pop %v471
  %v540 = vmul.f32 1.0, %v539
  %v541 = vrcp.pop %v472
  %v542 = vmul.f32 1.0, %v541
  %v543 = vrcp.pop %v473
  %v544 = vmul.f32 1.0, %v543
  %v545 = vrcp.pop %v474
  %v546 = vmul.f32 1.0, %v545
  %v547 = vrcp.pop %v475
  %v548 = vmul.f32 1.0, %v547
  %v549 = vrcp.pop %v476
  %v550 = vmul.f32 1.0, %v549
  %v551 = vrcp.pop %v477
  %v552 = vmul.f32 1.0, %v551
  %v553 = vrcp.pop %v478
  %v554 = vmul.f32 1.0, %v553
  %v555 = vrcp.pop %v479
  %v556 = vmul.f32 1.0, %v555
  %v557 = vrcp.pop %v480
  %v558 = vmul.f32 1.0, %v557
  %v559 = vrcp.pop %v481
  %v560 = vmul.f32 1.0, %v559
  %v561 = vrcp.pop %v482
  %v562 = vmul.f32 1.0, %v561
  %v563 = vrcp.pop %v483
  %v564 = vmul.f32 1.0, %v563
  %v565 = vrcp.pop %v484
  %v566 = vmul.f32 1.0, %v565
  %v567 = vrcp.pop %v485
  %v568 = vmul.f32 1.0, %v567
  %v569 = vrcp.pop %v486
  %v570 = vmul.f32 1.0, %v569
  %v571 = vld [vmem:[%s3] sm:$0xff]
  %v572 = vld [vmem:[%s3 + $0x8] sm:$0xff]
  %v573 = vld [vmem:[%s3 + $0x10] sm:$0xff]
  %v574 = vld [vmem:[%s3 + $0x18] sm:$0xff]
  %v575 = vld [vmem:[%s3 + $0x20] sm:$0xff]
  %v576 = vld [vmem:[%s3 + $0x28] sm:$0xff]
  %v577 = vld [vmem:[%s3 + $0x30] sm:$0xff]
  %v578 = vld [vmem:[%s3 + $0x38] sm:$0xff]
  %v579 = vld [vmem:[%s3 + $0x40] sm:$0xff]
  %v580 = vld [vmem:[%s3 + $0x48] sm:$0xff]
  %v581 = vld [vmem:[%s3 + $0x50] sm:$0xff]
  %v582 = vld [vmem:[%s3 + $0x58] sm:$0xff]
  %v583 = vld [vmem:[%s3 + $0x60] sm:$0xff]
  %v584 = vld [vmem:[%s3 + $0x68] sm:$0xff]
  %v585 = vld [vmem:[%s3 + $0x70] sm:$0xff]
  %v586 = vld [vmem:[%s3 + $0x78] sm:$0xff]
  %v587 = vld [vmem:[%s3 + $0x80] sm:$0xff]
  %v588 = vld [vmem:[%s3 + $0x88] sm:$0xff]
  %v589 = vld [vmem:[%s3 + $0x90] sm:$0xff]
  %v590 = vld [vmem:[%s3 + $0x98] sm:$0xff]
  %v591 = vld [vmem:[%s3 + $0xa0] sm:$0xff]
  %v592 = vld [vmem:[%s3 + $0xa8] sm:$0xff]
  %v593 = vld [vmem:[%s3 + $0xb0] sm:$0xff]
  %v594 = vld [vmem:[%s3 + $0xb8] sm:$0xff]
  %v595 = vld [vmem:[%s3 + $0xc0] sm:$0xff]
  %v596 = vld [vmem:[%s3 + $0xc8] sm:$0xff]
  %v597 = vld [vmem:[%s3 + $0xd0] sm:$0xff]
  %v598 = vld [vmem:[%s3 + $0xd8] sm:$0xff]
  %v599 = vld [vmem:[%s3 + $0xe0] sm:$0xff]
  %v600 = vld [vmem:[%s3 + $0xe8] sm:$0xff]
  %v601 = vld [vmem:[%s3 + $0xf0] sm:$0xff]
  %v602 = vld [vmem:[%s3 + $0xf8] sm:$0xff]
  %v603 = vld [vmem:[%s3 + $0x100] sm:$0xff]
  %v604 = vld [vmem:[%s3 + $0x108] sm:$0xff]
  %v605 = vld [vmem:[%s3 + $0x110] sm:$0xff]
  %v606 = vld [vmem:[%s3 + $0x118] sm:$0xff]
  %v607 = vld [vmem:[%s3 + $0x120] sm:$0xff]
  %v608 = vld [vmem:[%s3 + $0x128] sm:$0xff]
  %v609 = vld [vmem:[%s3 + $0x130] sm:$0xff]
  %v610 = vld [vmem:[%s3 + $0x138] sm:$0xff]
  %v611 = vld [vmem:[%s3 + $0x140] sm:$0xff]
  %v612 = vld [vmem:[%s3 + $0x148] sm:$0xff]
  %v613 = vld [vmem:[%s3 + $0x150] sm:$0xff]
  %v614 = vld [vmem:[%s3 + $0x158] sm:$0xff]
  %v615 = vld [vmem:[%s3 + $0x160] sm:$0xff]
  %v616 = vld [vmem:[%s3 + $0x168] sm:$0xff]
  %v617 = vld [vmem:[%s3 + $0x170] sm:$0xff]
  %v618 = vld [vmem:[%s3 + $0x178] sm:$0xff]
  %v619 = vld [vmem:[%s3 + $0x180] sm:$0xff]
  %v620 = vld [vmem:[%s3 + $0x188] sm:$0xff]
  %v621 = vld [vmem:[%s3 + $0x190] sm:$0xff]
  %v622 = vld [vmem:[%s3 + $0x198] sm:$0xff]
  %v623 = vld [vmem:[%s3 + $0x1a0] sm:$0xff]
  %v624 = vld [vmem:[%s3 + $0x1a8] sm:$0xff]
  %v625 = vld [vmem:[%s3 + $0x1b0] sm:$0xff]
  %v626 = vld [vmem:[%s3 + $0x1b8] sm:$0xff]
  %v627 = vld [vmem:[%s3 + $0x1c0] sm:$0xff]
  %v628 = vld [vmem:[%s3 + $0x1c8] sm:$0xff]
  %v629 = vld [vmem:[%s3 + $0x1d0] sm:$0xff]
  %v630 = vld [vmem:[%s3 + $0x1d8] sm:$0xff]
  %v631 = vld [vmem:[%s3 + $0x1e0] sm:$0xff]
  %v632 = vld [vmem:[%s3 + $0x1e8] sm:$0xff]
  %v633 = vld [vmem:[%s3 + $0x1f0] sm:$0xff]
  %v634 = vld [vmem:[%s3 + $0x1f8] sm:$0xff]
  %v635 = vld [vmem:[%s3 + $0x200] sm:$0xff]
  %v636 = vld [vmem:[%s3 + $0x208] sm:$0xff]
  %v637 = vld [vmem:[%s3 + $0x210] sm:$0xff]
  %v638 = vld [vmem:[%s3 + $0x218] sm:$0xff]
  %v639 = vld [vmem:[%s3 + $0x220] sm:$0xff]
  %v640 = vld [vmem:[%s3 + $0x228] sm:$0xff]
  %v641 = vld [vmem:[%s3 + $0x230] sm:$0xff]
  %v642 = vld [vmem:[%s3 + $0x238] sm:$0xff]
  %v643 = vld [vmem:[%s3 + $0x240] sm:$0xff]
  %v644 = vld [vmem:[%s3 + $0x248] sm:$0xff]
  %v645 = vld [vmem:[%s3 + $0x250] sm:$0xff]
  %v646 = vld [vmem:[%s3 + $0x258] sm:$0xff]
  %v647 = vld [vmem:[%s3 + $0x260] sm:$0xff]
  %v648 = vld [vmem:[%s3 + $0x268] sm:$0xff]
  %v649 = vld [vmem:[%s3 + $0x270] sm:$0xff]
  %v650 = vld [vmem:[%s3 + $0x278] sm:$0xff]
  %v651 = vld [vmem:[%s3 + $0x280] sm:$0xff]
  %v652 = vld [vmem:[%s3 + $0x288] sm:$0xff]
  %v653 = vld [vmem:[%s3 + $0x290] sm:$0xff]
  %v654 = vld [vmem:[%s3 + $0x298] sm:$0xff]
  %656 = vset.pattern.permute.xlu0 0
  %657 = vperm.xlu0 %656, %v488
  %v658 = vpop.permute.xlu0 %657
  %661 = vset.pattern.permute.xlu0 0
  %662 = vperm.xlu0 %661, %v490
  %v663 = vpop.permute.xlu0 %662
  %666 = vset.pattern.permute.xlu0 0
  %667 = vperm.xlu0 %666, %v492
  %v668 = vpop.permute.xlu0 %667
  %671 = vset.pattern.permute.xlu0 0
  %672 = vperm.xlu0 %671, %v494
  %v673 = vpop.permute.xlu0 %672
  %676 = vset.pattern.permute.xlu0 0
  %677 = vperm.xlu0 %676, %v496
  %v678 = vpop.permute.xlu0 %677
  %681 = vset.pattern.permute.xlu0 0
  %682 = vperm.xlu0 %681, %v498
  %v683 = vpop.permute.xlu0 %682
  %686 = vset.pattern.permute.xlu0 0
  %687 = vperm.xlu0 %686, %v500
  %v688 = vpop.permute.xlu0 %687
  %691 = vset.pattern.permute.xlu0 0
  %692 = vperm.xlu0 %691, %v502
  %v693 = vpop.permute.xlu0 %692
  %696 = vset.pattern.permute.xlu0 0
  %697 = vperm.xlu0 %696, %v504
  %v698 = vpop.permute.xlu0 %697
  %701 = vset.pattern.permute.xlu0 0
  %702 = vperm.xlu0 %701, %v506
  %v703 = vpop.permute.xlu0 %702
  %706 = vset.pattern.permute.xlu0 0
  %707 = vperm.xlu0 %706, %v508
  %v708 = vpop.permute.xlu0 %707
  %711 = vset.pattern.permute.xlu0 0
  %712 = vperm.xlu0 %711, %v510
  %v713 = vpop.permute.xlu0 %712
  %716 = vset.pattern.permute.xlu0 0
  %717 = vperm.xlu0 %716, %v512
  %v718 = vpop.permute.xlu0 %717
  %721 = vset.pattern.permute.xlu0 0
  %722 = vperm.xlu0 %721, %v514
  %v723 = vpop.permute.xlu0 %722
  %726 = vset.pattern.permute.xlu0 0
  %727 = vperm.xlu0 %726, %v516
  %v728 = vpop.permute.xlu0 %727
  %731 = vset.pattern.permute.xlu0 0
  %732 = vperm.xlu0 %731, %v518
  %v733 = vpop.permute.xlu0 %732
  %736 = vset.pattern.permute.xlu0 0
  %737 = vperm.xlu0 %736, %v520
  %v738 = vpop.permute.xlu0 %737
  %741 = vset.pattern.permute.xlu0 0
  %742 = vperm.xlu0 %741, %v522
  %v743 = vpop.permute.xlu0 %742
  %746 = vset.pattern.permute.xlu0 0
  %747 = vperm.xlu0 %746, %v524
  %v748 = vpop.permute.xlu0 %747
  %751 = vset.pattern.permute.xlu0 0
  %752 = vperm.xlu0 %751, %v526
  %v753 = vpop.permute.xlu0 %752
  %756 = vset.pattern.permute.xlu0 0
  %757 = vperm.xlu0 %756, %v528
  %v758 = vpop.permute.xlu0 %757
  %761 = vset.pattern.permute.xlu0 0
  %762 = vperm.xlu0 %761, %v530
  %v763 = vpop.permute.xlu0 %762
  %766 = vset.pattern.permute.xlu0 0
  %767 = vperm.xlu0 %766, %v532
  %v768 = vpop.permute.xlu0 %767
  %771 = vset.pattern.permute.xlu0 0
  %772 = vperm.xlu0 %771, %v534
  %v773 = vpop.permute.xlu0 %772
  %776 = vset.pattern.permute.xlu0 0
  %777 = vperm.xlu0 %776, %v536
  %v778 = vpop.permute.xlu0 %777
  %781 = vset.pattern.permute.xlu0 0
  %782 = vperm.xlu0 %781, %v538
  %v783 = vpop.permute.xlu0 %782
  %786 = vset.pattern.permute.xlu0 0
  %787 = vperm.xlu0 %786, %v540
  %v788 = vpop.permute.xlu0 %787
  %791 = vset.pattern.permute.xlu0 0
  %792 = vperm.xlu0 %791, %v542
  %v793 = vpop.permute.xlu0 %792
  %796 = vset.pattern.permute.xlu0 0
  %797 = vperm.xlu0 %796, %v544
  %v798 = vpop.permute.xlu0 %797
  %801 = vset.pattern.permute.xlu0 0
  %802 = vperm.xlu0 %801, %v546
  %v803 = vpop.permute.xlu0 %802
  %806 = vset.pattern.permute.xlu0 0
  %807 = vperm.xlu0 %806, %v548
  %v808 = vpop.permute.xlu0 %807
  %811 = vset.pattern.permute.xlu0 0
  %812 = vperm.xlu0 %811, %v550
  %v813 = vpop.permute.xlu0 %812
  %816 = vset.pattern.permute.xlu0 0
  %817 = vperm.xlu0 %816, %v552
  %v818 = vpop.permute.xlu0 %817
  %821 = vset.pattern.permute.xlu0 0
  %822 = vperm.xlu0 %821, %v554
  %v823 = vpop.permute.xlu0 %822
  %826 = vset.pattern.permute.xlu0 0
  %827 = vperm.xlu0 %826, %v556
  %v828 = vpop.permute.xlu0 %827
  %831 = vset.pattern.permute.xlu0 0
  %832 = vperm.xlu0 %831, %v558
  %v833 = vpop.permute.xlu0 %832
  %836 = vset.pattern.permute.xlu0 0
  %837 = vperm.xlu0 %836, %v560
  %v838 = vpop.permute.xlu0 %837
  %841 = vset.pattern.permute.xlu0 0
  %842 = vperm.xlu0 %841, %v562
  %v843 = vpop.permute.xlu0 %842
  %846 = vset.pattern.permute.xlu0 0
  %847 = vperm.xlu0 %846, %v564
  %v848 = vpop.permute.xlu0 %847
  %851 = vset.pattern.permute.xlu0 0
  %852 = vperm.xlu0 %851, %v566
  %v853 = vpop.permute.xlu0 %852
  %856 = vset.pattern.permute.xlu0 0
  %857 = vperm.xlu0 %856, %v568
  %v858 = vpop.permute.xlu0 %857
  %861 = vset.pattern.permute.xlu0 0
  %862 = vperm.xlu0 %861, %v570
  %v863 = vpop.permute.xlu0 %862
  %v865 = vmul.f32 %v571, %v658
  %v866 = vmul.f32 %v572, %v658
  %v867 = vmul.f32 %v573, %v663
  %v868 = vmul.f32 %v574, %v663
  %v869 = vmul.f32 %v575, %v668
  %v870 = vmul.f32 %v576, %v668
  %v871 = vmul.f32 %v577, %v673
  %v872 = vmul.f32 %v578, %v673
  %v873 = vmul.f32 %v579, %v678
  %v874 = vmul.f32 %v580, %v678
  %v875 = vmul.f32 %v581, %v683
  %v876 = vmul.f32 %v582, %v683
  %v877 = vmul.f32 %v583, %v688
  %v878 = vmul.f32 %v584, %v688
  %v879 = vmul.f32 %v585, %v693
  %v880 = vmul.f32 %v586, %v693
  %v881 = vmul.f32 %v587, %v698
  %v882 = vmul.f32 %v588, %v698
  %v883 = vmul.f32 %v589, %v703
  %v884 = vmul.f32 %v590, %v703
  %v885 = vmul.f32 %v591, %v708
  %v886 = vmul.f32 %v592, %v708
  %v887 = vmul.f32 %v593, %v713
  %v888 = vmul.f32 %v594, %v713
  %v889 = vmul.f32 %v595, %v718
  %v890 = vmul.f32 %v596, %v718
  %v891 = vmul.f32 %v597, %v723
  %v892 = vmul.f32 %v598, %v723
  %v893 = vmul.f32 %v599, %v728
  %v894 = vmul.f32 %v600, %v728
  %v895 = vmul.f32 %v601, %v733
  %v896 = vmul.f32 %v602, %v733
  %v897 = vmul.f32 %v603, %v738
  %v898 = vmul.f32 %v604, %v738
  %v899 = vmul.f32 %v605, %v743
  %v900 = vmul.f32 %v606, %v743
  %v901 = vmul.f32 %v607, %v748
  %v902 = vmul.f32 %v608, %v748
  %v903 = vmul.f32 %v609, %v753
  %v904 = vmul.f32 %v610, %v753
  %v905 = vmul.f32 %v611, %v758
  %v906 = vmul.f32 %v612, %v758
  %v907 = vmul.f32 %v613, %v763
  %v908 = vmul.f32 %v614, %v763
  %v909 = vmul.f32 %v615, %v768
  %v910 = vmul.f32 %v616, %v768
  %v911 = vmul.f32 %v617, %v773
  %v912 = vmul.f32 %v618, %v773
  %v913 = vmul.f32 %v619, %v778
  %v914 = vmul.f32 %v620, %v778
  %v915 = vmul.f32 %v621, %v783
  %v916 = vmul.f32 %v622, %v783
  %v917 = vmul.f32 %v623, %v788
  %v918 = vmul.f32 %v624, %v788
  %v919 = vmul.f32 %v625, %v793
  %v920 = vmul.f32 %v626, %v793
  %v921 = vmul.f32 %v627, %v798
  %v922 = vmul.f32 %v628, %v798
  %v923 = vmul.f32 %v629, %v803
  %v924 = vmul.f32 %v630, %v803
  %v925 = vmul.f32 %v631, %v808
  %v926 = vmul.f32 %v632, %v808
  %v927 = vmul.f32 %v633, %v813
  %v928 = vmul.f32 %v634, %v813
  %v929 = vmul.f32 %v635, %v818
  %v930 = vmul.f32 %v636, %v818
  %v931 = vmul.f32 %v637, %v823
  %v932 = vmul.f32 %v638, %v823
  %v933 = vmul.f32 %v639, %v828
  %v934 = vmul.f32 %v640, %v828
  %v935 = vmul.f32 %v641, %v833
  %v936 = vmul.f32 %v642, %v833
  %v937 = vmul.f32 %v643, %v838
  %v938 = vmul.f32 %v644, %v838
  %v939 = vmul.f32 %v645, %v843
  %v940 = vmul.f32 %v646, %v843
  %v941 = vmul.f32 %v647, %v848
  %v942 = vmul.f32 %v648, %v848
  %v943 = vmul.f32 %v649, %v853
  %v944 = vmul.f32 %v650, %v853
  %v945 = vmul.f32 %v651, %v858
  %v946 = vmul.f32 %v652, %v858
  %v947 = vmul.f32 %v653, %v863
  %v948 = vmul.f32 %v654, %v863
  %949 = vst [vmem:[%s4] sm:$0xff] %v865
  %vm950 = vcmask 556032
  %951 = vst.msk [vmem:[%s4 + $0x8] sm:$0xff] %vm950, %v866
  %952 = vst [vmem:[%s4 + $0x10] sm:$0xff] %v867
  %953 = vst.msk [vmem:[%s4 + $0x18] sm:$0xff] %vm950, %v868
  %954 = vst [vmem:[%s4 + $0x20] sm:$0xff] %v869
  %955 = vst.msk [vmem:[%s4 + $0x28] sm:$0xff] %vm950, %v870
  %956 = vst [vmem:[%s4 + $0x30] sm:$0xff] %v871
  %957 = vst.msk [vmem:[%s4 + $0x38] sm:$0xff] %vm950, %v872
  %958 = vst [vmem:[%s4 + $0x40] sm:$0xff] %v873
  %959 = vst.msk [vmem:[%s4 + $0x48] sm:$0xff] %vm950, %v874
  %960 = vst [vmem:[%s4 + $0x50] sm:$0xff] %v875
  %961 = vst.msk [vmem:[%s4 + $0x58] sm:$0xff] %vm950, %v876
  %962 = vst [vmem:[%s4 + $0x60] sm:$0xff] %v877
  %963 = vst.msk [vmem:[%s4 + $0x68] sm:$0xff] %vm950, %v878
  %964 = vst [vmem:[%s4 + $0x70] sm:$0xff] %v879
  %965 = vst.msk [vmem:[%s4 + $0x78] sm:$0xff] %vm950, %v880
  %966 = vst [vmem:[%s4 + $0x80] sm:$0xff] %v881
  %967 = vst.msk [vmem:[%s4 + $0x88] sm:$0xff] %vm950, %v882
  %968 = vst [vmem:[%s4 + $0x90] sm:$0xff] %v883
  %969 = vst.msk [vmem:[%s4 + $0x98] sm:$0xff] %vm950, %v884
  %970 = vst [vmem:[%s4 + $0xa0] sm:$0xff] %v885
  %971 = vst.msk [vmem:[%s4 + $0xa8] sm:$0xff] %vm950, %v886
  %972 = vst [vmem:[%s4 + $0xb0] sm:$0xff] %v887
  %973 = vst.msk [vmem:[%s4 + $0xb8] sm:$0xff] %vm950, %v888
  %974 = vst [vmem:[%s4 + $0xc0] sm:$0xff] %v889
  %975 = vst.msk [vmem:[%s4 + $0xc8] sm:$0xff] %vm950, %v890
  %976 = vst [vmem:[%s4 + $0xd0] sm:$0xff] %v891
  %977 = vst.msk [vmem:[%s4 + $0xd8] sm:$0xff] %vm950, %v892
  %978 = vst [vmem:[%s4 + $0xe0] sm:$0xff] %v893
  %979 = vst.msk [vmem:[%s4 + $0xe8] sm:$0xff] %vm950, %v894
  %980 = vst [vmem:[%s4 + $0xf0] sm:$0xff] %v895
  %981 = vst.msk [vmem:[%s4 + $0xf8] sm:$0xff] %vm950, %v896
  %982 = vst [vmem:[%s4 + $0x100] sm:$0xff] %v897
  %983 = vst.msk [vmem:[%s4 + $0x108] sm:$0xff] %vm950, %v898
  %984 = vst [vmem:[%s4 + $0x110] sm:$0xff] %v899
  %985 = vst.msk [vmem:[%s4 + $0x118] sm:$0xff] %vm950, %v900
  %986 = vst [vmem:[%s4 + $0x120] sm:$0xff] %v901
  %987 = vst.msk [vmem:[%s4 + $0x128] sm:$0xff] %vm950, %v902
  %988 = vst [vmem:[%s4 + $0x130] sm:$0xff] %v903
  %989 = vst.msk [vmem:[%s4 + $0x138] sm:$0xff] %vm950, %v904
  %990 = vst [vmem:[%s4 + $0x140] sm:$0xff] %v905
  %991 = vst.msk [vmem:[%s4 + $0x148] sm:$0xff] %vm950, %v906
  %992 = vst [vmem:[%s4 + $0x150] sm:$0xff] %v907
  %993 = vst.msk [vmem:[%s4 + $0x158] sm:$0xff] %vm950, %v908
  %994 = vst [vmem:[%s4 + $0x160] sm:$0xff] %v909
  %995 = vst.msk [vmem:[%s4 + $0x168] sm:$0xff] %vm950, %v910
  %996 = vst [vmem:[%s4 + $0x170] sm:$0xff] %v911
  %997 = vst.msk [vmem:[%s4 + $0x178] sm:$0xff] %vm950, %v912
  %998 = vst [vmem:[%s4 + $0x180] sm:$0xff] %v913
  %999 = vst.msk [vmem:[%s4 + $0x188] sm:$0xff] %vm950, %v914
  %1000 = vst [vmem:[%s4 + $0x190] sm:$0xff] %v915
  %1001 = vst.msk [vmem:[%s4 + $0x198] sm:$0xff] %vm950, %v916
  %1002 = vst [vmem:[%s4 + $0x1a0] sm:$0xff] %v917
  %1003 = vst.msk [vmem:[%s4 + $0x1a8] sm:$0xff] %vm950, %v918
  %1004 = vst [vmem:[%s4 + $0x1b0] sm:$0xff] %v919
  %1005 = vst.msk [vmem:[%s4 + $0x1b8] sm:$0xff] %vm950, %v920
  %1006 = vst [vmem:[%s4 + $0x1c0] sm:$0xff] %v921
  %1007 = vst.msk [vmem:[%s4 + $0x1c8] sm:$0xff] %vm950, %v922
  %1008 = vst [vmem:[%s4 + $0x1d0] sm:$0xff] %v923
  %1009 = vst.msk [vmem:[%s4 + $0x1d8] sm:$0xff] %vm950, %v924
  %1010 = vst [vmem:[%s4 + $0x1e0] sm:$0xff] %v925
  %1011 = vst.msk [vmem:[%s4 + $0x1e8] sm:$0xff] %vm950, %v926
  %1012 = vst [vmem:[%s4 + $0x1f0] sm:$0xff] %v927
  %1013 = vst.msk [vmem:[%s4 + $0x1f8] sm:$0xff] %vm950, %v928
  %1014 = vst [vmem:[%s4 + $0x200] sm:$0xff] %v929
  %1015 = vst.msk [vmem:[%s4 + $0x208] sm:$0xff] %vm950, %v930
  %1016 = vst [vmem:[%s4 + $0x210] sm:$0xff] %v931
  %1017 = vst.msk [vmem:[%s4 + $0x218] sm:$0xff] %vm950, %v932
  %1018 = vst [vmem:[%s4 + $0x220] sm:$0xff] %v933
  %1019 = vst.msk [vmem:[%s4 + $0x228] sm:$0xff] %vm950, %v934
  %1020 = vst [vmem:[%s4 + $0x230] sm:$0xff] %v935
  %1021 = vst.msk [vmem:[%s4 + $0x238] sm:$0xff] %vm950, %v936
  %1022 = vst [vmem:[%s4 + $0x240] sm:$0xff] %v937
  %1023 = vst.msk [vmem:[%s4 + $0x248] sm:$0xff] %vm950, %v938
  %1024 = vst [vmem:[%s4 + $0x250] sm:$0xff] %v939
  %1025 = vst.msk [vmem:[%s4 + $0x258] sm:$0xff] %vm950, %v940
  %1026 = vst [vmem:[%s4 + $0x260] sm:$0xff] %v941
  %1027 = vst.msk [vmem:[%s4 + $0x268] sm:$0xff] %vm950, %v942
  %1028 = vst [vmem:[%s4 + $0x270] sm:$0xff] %v943
  %1029 = vst.msk [vmem:[%s4 + $0x278] sm:$0xff] %vm950, %v944
  %1030 = vst [vmem:[%s4 + $0x280] sm:$0xff] %v945
  %1031 = vst.msk [vmem:[%s4 + $0x288] sm:$0xff] %vm950, %v946
  %1032 = vst [vmem:[%s4 + $0x290] sm:$0xff] %v947
  %1033 = vst.msk [vmem:[%s4 + $0x298] sm:$0xff] %vm950, %v948
  // Predicated region
  $region18: #{tpu_custom_call.1} parent=0 // pred_check
    _
  $region19: #{tpu_custom_call.1} parent=0 // pred_check_branch
    %1035 = sbr.rel (0) target = $region21
  $region20: #{tpu_custom_call.1} parent=0 // pred_region
    _
  $region21: #{tpu_custom_call.1} parent=0 // pred_fallthru
    _
  // Predicated region
  $region22: #{tpu_custom_call.1} parent=0 // pred_check
    _
  $region23: #{tpu_custom_call.1} parent=0 // pred_check_branch
    %1037 = sbr.rel (0) target = $region25
  $region24: #{tpu_custom_call.1} parent=0 // pred_region
    _
  $region25: #{tpu_custom_call.1} parent=0 // pred_fallthru
    _

</llo_original>
